<compile_context>
chip_gen: v7x
topology: tpu7x:2x2x1
jax: 0.10.0
libtpu: 0.0.40
codegen_flags: <defaults>
</compile_context>

<pallas_src>
import math

import jax
import jax.numpy as jnp
from jax.experimental import pallas as pl
from jax.experimental.pallas import tpu as pltpu

_EPS = float(jnp.finfo(jnp.float32).eps)
_LOG_EPS = math.log(_EPS)


def _pick_view_block(n_views):
    """Views per grid step: amortize per-step overhead but keep >=2 steps (v7x 2 TCs)."""
    if n_views < 4:
        return 1
    best = 1
    for cand in range(2, min(8, n_views // 2) + 1):
        if n_views % cand == 0:
            best = cand
    return best


def _make_aug_kernel(do_mix, do_rrc, do_rlf, bb, z_shared):
    """Fused augmentation kernel, specialized on enabled transforms.

    Refs (after the scalar-prefetch alpha ref), in order:
        x_ref                 VMEM (1,   F, T) f32   input log-mel (shared by all views)
        [z_ref]  if do_mix    VMEM (1|bb,F, T) f32   mixup memory / per-view noise
        [af_ref] if do_rrc    VMEM (bb,  F, F) bf16  freq crop+resize matrices
        [bt_ref] if do_rrc    VMEM (bb,  T, T) bf16  time crop+resize matrices (pre-T)
        [fd_ref] if do_rlf    VMEM (bb,  1, T) f32   precomputed linear-fader rows
        out_ref               VMEM (bb,  F, T) f32
    """

    def kernel(*args):
        alpha_ref = args[0]                       # SMEM (n_views,) f32
        idx = 1
        x_ref = args[idx]; idx += 1
        z_ref = af_ref = bt_ref = fd_ref = None
        if do_mix:
            z_ref = args[idx]; idx += 1
        if do_rrc:
            af_ref = args[idx]; idx += 1
            bt_ref = args[idx]; idx += 1
        if do_rlf:
            fd_ref = args[idx]; idx += 1
        out_ref = args[idx]

        i = pl.program_id(0)
        x = x_ref[0]                              # shared across every view
        z_sh = z_ref[0] if (do_mix and z_shared) else None

        for v in range(bb):                       # static unroll (bb kept small)
            y = x
            # --- MixupBYOLA / MixGaussianNoise: stable log-domain mix (3 EUP ops) ---
            if do_mix:
                alpha = alpha_ref[i * bb + v]
                z = z_sh if z_shared else z_ref[v]
                mx = jnp.maximum(y, z)
                mn = jnp.minimum(y, z)
                w_hi = jnp.where(y >= z, 1.0 - alpha, alpha)
                # log((1-a)e^x + a e^z + eps) = mx + log(w_hi + w_lo*e^(mn-mx) + eps*e^-mx)
                # exact for mx >= log(eps); the clamp only guards exp overflow.
                inner = (w_hi + (1.0 - w_hi) * jnp.exp(mn - mx)
                         + _EPS * jnp.exp(-jnp.maximum(mx, _LOG_EPS)))
                y = mx + jnp.log(inner)
            # --- RandomResizeCrop: crop-of-virtual-canvas + resize == 2 matmuls (MXU) ---
            if do_rrc:
                tmp = jnp.dot(af_ref[v], y.astype(jnp.bfloat16),
                              preferred_element_type=jnp.float32)        # (F, T)
                y = jnp.dot(tmp.astype(jnp.bfloat16), bt_ref[v],
                            preferred_element_type=jnp.float32)          # (F, T)
            # --- RandomLinearFader: precomputed (1, T) ramp, one broadcast add ---
            if do_rlf:
                y = y + fd_ref[v]
            out_ref[v] = y.astype(out_ref.dtype)

    return kernel


def _crop_resize_matrix(out_size, canvas_size, place_off, place_len, crop_off, crop_len):
    """(out_size, place_len) bf16 linear map: crop [crop_off, crop_off+crop_len) of the
    zero-padded virtual canvas (input placed at [place_off, place_off+place_len)) and
    resize back to out_size (align_corners=True).  Built directly over the placed
    columns with broadcast-compare one-hots (no canvas-wide intermediate, no scatter).
    # TODO(synk): PyTorch RandomResizeCrop uses bicubic interpolation; 2-tap bilinear here.
    # TODO(synk): for long audio pass the 2-tap weights+indices instead of a dense (T, T).
    """
    o = jnp.arange(out_size, dtype=jnp.float32)
    denom = float(max(out_size - 1, 1))
    src = o * (crop_len.astype(jnp.float32) - 1.0) / denom       # position inside crop
    canvas_pos = crop_off.astype(jnp.float32) + src              # absolute canvas pos
    s0 = jnp.floor(canvas_pos)
    frac = canvas_pos - s0
    s0i = s0.astype(jnp.int32)
    s1i = jnp.minimum(s0i + 1, canvas_size - 1)
    cols = place_off + jnp.arange(place_len, dtype=jnp.int32)[None, :]
    w = ((cols == s0i[:, None]).astype(jnp.float32) * (1.0 - frac)[:, None]
         + (cols == s1i[:, None]).astype(jnp.float32) * frac[:, None])
    return w.astype(jnp.bfloat16)


class AudioPairTransform:
    """JAX/Pallas port of the PyTorch AudioPairTransform module (fused, pair in one call)."""

    def __init__(self, args, train_transform=True, pair_transform=True,
                 mixup_ratio=0.2, gauss_noise_ratio=0.3,
                 virtual_crop_scale=(1.0, 1.5),
                 freq_scale=(0.6, 1.5), time_scale=(0.6, 1.5), rlf_gain=1.0):
        self.train_transform = train_transform
        self.pair_transform = pair_transform
        self.mixup = bool(getattr(args, "mixup", False))
        self.gnoise = (not self.mixup) and bool(getattr(args, "Gnoise", False))
        self.rrc = bool(getattr(args, "RRC", False))
        self.rlf = bool(getattr(args, "RLF", False))
        self.mixup_ratio = float(mixup_ratio)
        self.gauss_noise_ratio = float(gauss_noise_ratio)
        self.virtual_crop_scale = virtual_crop_scale
        self.freq_scale = freq_scale
        self.time_scale = time_scale
        self.rlf_gain = float(rlf_gain)
        # TODO(synk): MixupBYOLA keeps a running memory bank of past log-mel samples; here
        # it is a fixed, deterministically generated "past" spectrogram shared by all views
        # (only alpha varies), so augmentation statistics differ from the reference.
        self._memory_key = jax.random.PRNGKey(1234)
        # Per-generation VMEM ceiling (leave headroom for Mosaic internal scratch).
        try:
            phys = int(pltpu.get_tpu_info().vmem_capacity_bytes)
        except Exception:
            phys = 64 << 20                      # conservative: v7x physical VMEM / TC
        self._vmem_cap = max(16 << 20, phys - (8 << 20))
        self._run = jax.jit(self._augment, static_argnames=("n_views",))

    # ----------------- jitted glue + ONE fused gridded pallas_call ------------------
    def _augment(self, x, key, *, n_views):
        """x: (..., F, T) single sample (leading dims multiply to 1, e.g. C=1).
        Returns (n_views,) + x.shape float32 — independently augmented views of x."""
        f, t = int(x.shape[-2]), int(x.shape[-1])
        x2 = x.reshape(f, t).astype(jnp.float32)
        nv = int(n_views)
        bb = _pick_view_block(nv)
        do_mix = self.mixup or self.gnoise
        do_rrc = self.rrc
        do_rlf = self.rlf

        k = jax.random.split(key, 7)

        # ---- mixup / gaussian-noise parameters ----
        z = None
        z_shared = True
        if self.mixup:
            alpha = self.mixup_ratio * jax.random.uniform(k[0], (nv,), jnp.float32)
            z = jax.random.normal(self._memory_key, (1, f, t), jnp.float32)
        elif self.gnoise:
            # TODO(synk): verify against reference MixGaussianNoise semantics (noise domain
            # and scaling) — this reuses the log-domain mixup formula with per-view noise.
            alpha = self.gauss_noise_ratio * jax.random.uniform(k[0], (nv,), jnp.float32)
            z = jax.random.normal(k[1], (nv, f, t), jnp.float32)
            z_shared = False
        else:
            alpha = jnp.zeros((nv,), jnp.float32)

        # ---- RandomResizeCrop parameters -> per-view bf16 interpolation matrices ----
        a_f = b_t = None
        if do_rrc:
            fv = int(round(f * self.virtual_crop_scale[0]))
            tv = int(round(t * self.virtual_crop_scale[1]))
            place_f0 = (fv - f) // 2
            place_t0 = (tv - t) // 2
            fs = jax.random.uniform(k[2], (nv,), jnp.float32,
                                    self.freq_scale[0], self.freq_scale[1])
            ts = jax.random.uniform(k[3], (nv,), jnp.float32,
                                    self.time_scale[0], self.time_scale[1])
            crop_h = jnp.clip(jnp.floor(f * fs).astype(jnp.int32), 1, fv)
            crop_w = jnp.clip(jnp.floor(t * ts).astype(jnp.int32), 1, tv)
            i_off = jax.random.randint(k[4], (nv,), 0, fv - crop_h + 1)
            j_off = jax.random.randint(k[5], (nv,), 0, tv - crop_w + 1)
            a_f = jax.vmap(
                lambda co, cl: _crop_resize_matrix(f, fv, place_f0, f, co, cl)
            )(i_off, crop_h)                                        # (nv, F, F) bf16
            w_t = jax.vmap(
                lambda co, cl: _crop_resize_matrix(t, tv, place_t0, t, co, cl)
            )(j_off, crop_w)                                        # (nv, T, T) bf16
            b_t = jnp.transpose(w_t, (0, 2, 1))                     # pre-transposed

        # ---- RandomLinearFader: precompute the per-view (1, T) gain ramp ----
        fader = None
        if do_rlf:
            ht = self.rlf_gain * (2.0 * jax.random.uniform(k[6], (nv, 2), jnp.float32) - 1.0)
            head, tail = ht[:, :1], ht[:, 1:]
            ramp = (jnp.arange(t, dtype=jnp.float32) / float(max(t - 1, 1)))[None, :]
            fader = (head + (tail - head) * ramp)[:, None, :]       # (nv, 1, T)

        # ---- operands / specs: x & shared z use a constant index_map (no duplication) ----
        smap = lambda i, a: (0, 0, 0)      # shared block, revisited every grid step
        vmap_ = lambda i, a: (i, 0, 0)     # per-view blocks
        operands = [x2[None]]
        in_specs = [pl.BlockSpec((1, f, t), smap)]
        if do_mix:
            operands.append(z)
            in_specs.append(pl.BlockSpec((1, f, t) if z_shared else (bb, f, t),
                                         smap if z_shared else vmap_))
        if do_rrc:
            operands += [a_f, b_t]
            in_specs += [pl.BlockSpec((bb, f, f), vmap_),
                         pl.BlockSpec((bb, t, t), vmap_)]
        if do_rlf:
            operands.append(fader)
            in_specs.append(pl.BlockSpec((bb, 1, t), vmap_))
        out_specs = pl.BlockSpec((bb, f, t), vmap_)

        # ---- VMEM budget: always set the scoped limit (v5e default is only 16 MiB,
        # v7x physical ceiling is 64 MiB), clamped per generation with headroom ----
        blk = f * t * 4                                          # x
        if do_mix:
            blk += (1 if z_shared else bb) * f * t * 4
        if do_rrc:
            blk += bb * (f * f + t * t) * 2
        if do_rlf:
            blk += bb * t * 4
        blk += bb * f * t * 4                                    # out
        needed = 2 * blk + (4 << 20)                             # double-buffer + margin
        vmem_limit = int(min(max(needed, 16 << 20), self._vmem_cap))

        flops = nv * ((2 * f * f * t + 2 * f * t * t) if do_rrc else 8 * f * t)
        trans = nv * 3 * f * t if do_mix else 0
        bytes_acc = (f * t * 4
                     + ((1 if z_shared else nv) * f * t * 4 if do_mix else 0)
                     + (nv * (f * f + t * t) * 2 if do_rrc else 0)
                     + (nv * t * 4 if do_rlf else 0)
                     + nv * f * t * 4)

        kernel = _make_aug_kernel(do_mix, do_rrc, do_rlf, bb, z_shared)
        out = pl.pallas_call(
            kernel,
            out_shape=jax.ShapeDtypeStruct((nv, f, t), jnp.float32),
            grid_spec=pltpu.PrefetchScalarGridSpec(
                num_scalar_prefetch=1,
                grid=(nv // bb,),
                in_specs=in_specs,
                out_specs=out_specs,
            ),
            compiler_params=pltpu.CompilerParams(
                dimension_semantics=("parallel",),
                vmem_limit_bytes=vmem_limit,
            ),
            cost_estimate=pl.CostEstimate(
                flops=int(flops), transcendentals=int(trans),
                bytes_accessed=int(bytes_acc)),
        )(alpha, *operands)

        return out.reshape((nv,) + x.shape)

    def __call__(self, x, key):
        if not self.train_transform:
            return (x, x) if self.pair_transform else x          # nn.Identity path
        if self.pair_transform:
            y = self._run(x, key, n_views=2)                     # both views in ONE call
            return y[0], y[1]
        return self._run(x, key, n_views=1)[0]


if __name__ == "__main__":
    class _Args:
        mixup = True
        Gnoise = False
        RRC = True
        RLF = True

    key = jax.random.PRNGKey(0)
    kx, kt, kt2, kt3 = jax.random.split(key, 4)
    C, F, T = 1, 64, 64
    # Synthetic "log-mel spectrogram" input (C=1, F, T).
    x = jax.random.normal(kx, (C, F, T), jnp.float32)

    # Full pipeline (mixup -> RRC -> RLF), pair of independently-augmented views.
    transform = AudioPairTransform(_Args(), train_transform=True, pair_transform=True)
    y1, y2 = transform(x, kt)
    jax.block_until_ready((y1, y2))
    assert y1.shape == x.shape and y2.shape == x.shape
    assert y1.dtype == jnp.float32 and y2.dtype == jnp.float32
    assert bool(jnp.all(jnp.isfinite(y1))) and bool(jnp.all(jnp.isfinite(y2)))
    assert not bool(jnp.allclose(y1, y2))            # the two views must differ

    # Multi-view call exercises the packed (bb > 1 views per grid step) path.
    y4 = transform._run(x, kt2, n_views=4)
    jax.block_until_ready(y4)
    assert y4.shape == (4,) + x.shape
    assert bool(jnp.all(jnp.isfinite(y4)))
    assert not bool(jnp.allclose(y4[0], y4[1]))

    # Gaussian-noise variant (per-view noise, no RRC/RLF).
    class _ArgsG:
        mixup = False
        Gnoise = True
        RRC = False
        RLF = False

    gtrans = AudioPairTransform(_ArgsG(), train_transform=True, pair_transform=True)
    g1, g2 = gtrans(x, kt3)
    jax.block_until_ready((g1, g2))
    assert bool(jnp.all(jnp.isfinite(g1))) and not bool(jnp.allclose(g1, g2))

    # All augmentations off -> empty nn.Sequential == identity (pass-through kernel).
    class _ArgsOff:
        mixup = False
        Gnoise = False
        RRC = False
        RLF = False

    ident = AudioPairTransform(_ArgsOff(), train_transform=True, pair_transform=False)
    y0 = ident(x, kt)
    jax.block_until_ready(y0)
    assert bool(jnp.allclose(y0, x, atol=0.0, rtol=0.0))

    print("KERNEL_OK")
</pallas_src>

<mosaic_0001>
module attributes {stable_mosaic.version = 11 : i64} {
  func.func @kernel(%arg0: i32, %arg1: memref<2xf32, #tpu.memory_space<smem>>, %arg2: memref<1x64x64xf32, #tpu.memory_space<vmem>>, %arg3: memref<1x64x64xf32, #tpu.memory_space<vmem>>, %arg4: memref<1x64x64xbf16, #tpu.memory_space<vmem>>, %arg5: memref<1x64x64xbf16, #tpu.memory_space<vmem>>, %arg6: memref<1x1x64xf32, #tpu.memory_space<vmem>>, %arg7: memref<1x64x64xf32, #tpu.memory_space<vmem>>) attributes {dimension_semantics = [#tpu.dimension_semantics<parallel>], iteration_bounds = array<i64: 2>, scalar_prefetch = 1 : i64, scratch_operands = 0 : i64, tpu.core_type = #tpu.core_type<tc>, window_params = [{pipeline_mode = #tpu.pipeline_mode<synchronous>, transform_indices = @transform_0, window_bounds = array<i64: 1, 64, 64>}, {pipeline_mode = #tpu.pipeline_mode<synchronous>, transform_indices = @transform_1, window_bounds = array<i64: 1, 64, 64>}, {transform_indices = @transform_2, window_bounds = array<i64: 1, 64, 64>}, {transform_indices = @transform_3, window_bounds = array<i64: 1, 64, 64>}, {transform_indices = @transform_4, window_bounds = array<i64: 1, 1, 64>}, {transform_indices = @transform_5, window_bounds = array<i64: 1, 64, 64>}]} {
    %c0 = arith.constant 0 : index
    %c0_0 = arith.constant 0 : index
    %c0_1 = arith.constant 0 : index
    %0 = vector.load %arg2[%c0, %c0_0, %c0_1] : memref<1x64x64xf32, #tpu.memory_space<vmem>>, vector<1x64x64xf32>
    %1 = vector.shape_cast %0 : vector<1x64x64xf32> to vector<64x64xf32>
    %c0_2 = arith.constant 0 : index
    %c0_3 = arith.constant 0 : index
    %c0_4 = arith.constant 0 : index
    %2 = vector.load %arg3[%c0_2, %c0_3, %c0_4] : memref<1x64x64xf32, #tpu.memory_space<vmem>>, vector<1x64x64xf32>
    %3 = vector.shape_cast %2 : vector<1x64x64xf32> to vector<64x64xf32>
    %c1_i32 = arith.constant 1 : i32
    %4 = arith.muli %arg0, %c1_i32 : i32
    %c0_i32 = arith.constant 0 : i32
    %5 = arith.addi %4, %c0_i32 : i32
    %6 = arith.index_cast %5 : i32 to index
    %7 = memref.load %arg1[%6] : memref<2xf32, #tpu.memory_space<smem>>
    %8 = arith.maximumf %1, %3 : vector<64x64xf32>
    %9 = arith.minimumf %1, %3 : vector<64x64xf32>
    %10 = arith.cmpf oge, %1, %3 : vector<64x64xf32>
    %cst = arith.constant 1.000000e+00 : f32
    %11 = arith.subf %cst, %7 : f32
    %12 = vector.broadcast %11 : f32 to vector<64x64xf32>
    %13 = vector.broadcast %7 : f32 to vector<64x64xf32>
    %14 = arith.select %10, %12, %13 : vector<64x64xi1>, vector<64x64xf32>
    %cst_5 = arith.constant 1.000000e+00 : f32
    %15 = vector.broadcast %cst_5 : f32 to vector<64x64xf32>
    %16 = arith.subf %15, %14 : vector<64x64xf32>
    %17 = arith.subf %9, %8 : vector<64x64xf32>
    %18 = math.exp %17 : vector<64x64xf32>
    %19 = arith.mulf %16, %18 : vector<64x64xf32>
    %20 = arith.addf %14, %19 : vector<64x64xf32>
    %cst_6 = arith.constant -15.9423847 : f32
    %21 = vector.broadcast %cst_6 : f32 to vector<64x64xf32>
    %22 = arith.maximumf %8, %21 : vector<64x64xf32>
    %cst_7 = arith.constant 0.000000e+00 : f32
    %23 = vector.broadcast %cst_7 : f32 to vector<64x64xf32>
    %24 = arith.subf %23, %22 : vector<64x64xf32>
    %25 = math.exp %24 : vector<64x64xf32>
    %cst_8 = arith.constant 1.1920929E-7 : f32
    %26 = vector.broadcast %cst_8 : f32 to vector<64x64xf32>
    %27 = arith.mulf %26, %25 : vector<64x64xf32>
    %28 = arith.addf %20, %27 : vector<64x64xf32>
    %29 = math.log %28 : vector<64x64xf32>
    %30 = arith.addf %8, %29 : vector<64x64xf32>
    %c0_9 = arith.constant 0 : index
    %c0_10 = arith.constant 0 : index
    %c0_11 = arith.constant 0 : index
    %31 = vector.load %arg4[%c0_9, %c0_10, %c0_11] : memref<1x64x64xbf16, #tpu.memory_space<vmem>>, vector<1x64x64xbf16>
    %32 = vector.shape_cast %31 : vector<1x64x64xbf16> to vector<64x64xbf16>
    %33 = arith.truncf %30 : vector<64x64xf32> to vector<64x64xbf16>
    %cst_12 = arith.constant dense<0.000000e+00> : vector<64x64xf32>
    %34 = tpu.matmul %32, %33, %cst_12 {dimension_numbers = #tpu.dot_dimension_numbers<[1], [0], [0], [1], [0, 0, 1, 1], [], []>} : vector<64x64xbf16>, vector<64x64xbf16>, vector<64x64xf32> -> vector<64x64xf32>
    %35 = arith.truncf %34 : vector<64x64xf32> to vector<64x64xbf16>
    %c0_13 = arith.constant 0 : index
    %c0_14 = arith.constant 0 : index
    %c0_15 = arith.constant 0 : index
    %36 = vector.load %arg5[%c0_13, %c0_14, %c0_15] : memref<1x64x64xbf16, #tpu.memory_space<vmem>>, vector<1x64x64xbf16>
    %37 = vector.shape_cast %36 : vector<1x64x64xbf16> to vector<64x64xbf16>
    %cst_16 = arith.constant dense<0.000000e+00> : vector<64x64xf32>
    %38 = tpu.matmul %35, %37, %cst_16 {dimension_numbers = #tpu.dot_dimension_numbers<[1], [0], [0], [1], [0, 0, 1, 1], [], []>} : vector<64x64xbf16>, vector<64x64xbf16>, vector<64x64xf32> -> vector<64x64xf32>
    %c0_17 = arith.constant 0 : index
    %c0_18 = arith.constant 0 : index
    %c0_19 = arith.constant 0 : index
    %39 = vector.load %arg6[%c0_17, %c0_18, %c0_19] : memref<1x1x64xf32, #tpu.memory_space<vmem>>, vector<1x1x64xf32>
    %40 = vector.shape_cast %39 : vector<1x1x64xf32> to vector<1x64xf32>
    %41 = vector.broadcast %40 : vector<1x64xf32> to vector<64x64xf32>
    %42 = arith.addf %38, %41 : vector<64x64xf32>
    %c0_20 = arith.constant 0 : index
    %c0_21 = arith.constant 0 : index
    %c0_22 = arith.constant 0 : index
    %43 = vector.load %arg7[%c0_20, %c0_21, %c0_22] : memref<1x64x64xf32, #tpu.memory_space<vmem>>, vector<1x64x64xf32>
    %44 = vector.shape_cast %43 : vector<1x64x64xf32> to vector<64x64xf32>
    %45 = vector.shape_cast %42 : vector<64x64xf32> to vector<1x64x64xf32>
    tpu.vector_store %arg7[%c0_20, %c0_21, %c0_22], %45 {strides = array<i32>} : memref<1x64x64xf32, #tpu.memory_space<vmem>>, vector<1x64x64xf32>,
    return
  }
  func.func @transform_0(%arg0: i32, %arg1: memref<2xf32, #tpu.memory_space<smem>>) -> (i32, i32, i32) {
    %c0_i32 = arith.constant 0 : i32
    %c0_i32_0 = arith.constant 0 : i32
    %c0_i32_1 = arith.constant 0 : i32
    %c0_i32_2 = arith.constant 0 : i32
    return %c0_i32, %c0_i32_0, %c0_i32_1 : i32, i32, i32
  }
  func.func @transform_1(%arg0: i32, %arg1: memref<2xf32, #tpu.memory_space<smem>>) -> (i32, i32, i32) {
    %c0_i32 = arith.constant 0 : i32
    %c0_i32_0 = arith.constant 0 : i32
    %c0_i32_1 = arith.constant 0 : i32
    %c0_i32_2 = arith.constant 0 : i32
    return %c0_i32, %c0_i32_0, %c0_i32_1 : i32, i32, i32
  }
  func.func @transform_2(%arg0: i32, %arg1: memref<2xf32, #tpu.memory_space<smem>>) -> (i32, i32, i32) {
    %c0_i32 = arith.constant 0 : i32
    %c0_i32_0 = arith.constant 0 : i32
    %c0_i32_1 = arith.constant 0 : i32
    return %arg0, %c0_i32, %c0_i32_0 : i32, i32, i32
  }
  func.func @transform_3(%arg0: i32, %arg1: memref<2xf32, #tpu.memory_space<smem>>) -> (i32, i32, i32) {
    %c0_i32 = arith.constant 0 : i32
    %c0_i32_0 = arith.constant 0 : i32
    %c0_i32_1 = arith.constant 0 : i32
    return %arg0, %c0_i32, %c0_i32_0 : i32, i32, i32
  }
  func.func @transform_4(%arg0: i32, %arg1: memref<2xf32, #tpu.memory_space<smem>>) -> (i32, i32, i32) {
    %c0_i32 = arith.constant 0 : i32
    %c0_i32_0 = arith.constant 0 : i32
    %c0_i32_1 = arith.constant 0 : i32
    return %arg0, %c0_i32, %c0_i32_0 : i32, i32, i32
  }
  func.func @transform_5(%arg0: i32, %arg1: memref<2xf32, #tpu.memory_space<smem>>) -> (i32, i32, i32) {
    %c0_i32 = arith.constant 0 : i32
    %c0_i32_0 = arith.constant 0 : i32
    %c0_i32_1 = arith.constant 0 : i32
    return %arg0, %c0_i32, %c0_i32_0 : i32, i32, i32
  }
}

</mosaic_0001>

<llo_original>
// kernel: _augment.1
$region0: #{_augment.1}
  #allocation0 [shape = 'u32[]', space=smem, size = 0x4, offset = 0x4, fixed_abs, tag = 'smem constant byte address 0x4 - core index']
  #allocation1 [shape = 'u32[144,128]{1,0:T(1,128)}', space=vmem, size = 0x12000, scoped, tag = 'internal scratch']
  #allocation2 [shape = 's32[1]{0}', space=sflag, size = 0x4, scoped, tag = 'scoped memory for _augment.1']
  #allocation3 [shape = 'u8[512]{0}', space=smem, size = 0x200, scoped, tag = 'prefetched SMEM operand 0']
  %s0 = inlined_call_operand.vmem [shape: f32[2], index: 0, kind: input, shape index: {}]
  %s1 = inlined_call_operand.vmem [shape: f32[1,64,64], index: 1, kind: input, shape index: {}]
  %s2 = inlined_call_operand.vmem [shape: f32[1,64,64], index: 2, kind: input, shape index: {}]
  %s3 = inlined_call_operand.vmem [shape: bf16[2,64,64], index: 3, kind: input, shape index: {}]
  %s4 = inlined_call_operand.vmem [shape: bf16[2,64,64], index: 4, kind: input, shape index: {}]
  %s5 = inlined_call_operand.vmem [shape: f32[2,1,64], index: 5, kind: input, shape index: {}]
  %s6 = inlined_call_operand.hbm [shape: f32[2,64,64], index: 6, kind: output, shape index: {}]
  %s7 = sld [smem:[#allocation0]]
  $region53: #{_augment.1} parent=0
    _
  %s9 = ssub.s32 1, %s7
  %s10 = scalar_select 0, %s9, %s7
  %s11 = sshll.u32 %s0, 4
  %s12 = int_to_ptr.vmem [resolvable:$true] %s11
  %14 = dma.vmem_to_smem %s12, 16, [#allocation3], [#allocation2]
  %15 = dma.done [#allocation2], 16
  %16 = sfence
  $region1: #{_augment.1} parent=0
    #allocation4 [shape = 'u8[65536]{0}', space=vmem, size = 0x10000, scoped, tag = 'output window, operand 0']
    #allocation5 [shape = 's32[2]{0}', space=sflag, size = 0x8, scoped, tag = 'scoped memory for _augment.1']
    %17 = vsyncpa [#allocation5], 0
    %s18 = scalar_lea.sflag [#allocation5], 1
    %19 = vsyncpa %s18, 0
    loop: start=0, step=1, limit=4
    $region2: #{_augment.1} parent=1 // loop_pre_header
      _
    $region3: #{_augment.1} parent=1 // loop_header
      %s21 = sphi 0, %s25
      %p22 = scmp.ge.s32.totalorder %s21, 4
      %s29 = sphi 0, %s29
      %s31 = sphi 0, %s29
      %s32 = sphi 0, %s31
      %s46 = sphi 0, %s32
      %s50 = sphi 0, %s50
      %s52 = sphi 0, %s50
      %s53 = sphi 0, %s52
      %s67 = sphi 0, %s53
      %s73 = sphi 0, %s75
      %s76 = sphi 0, %s73
      %s77 = sphi 0, %s76
      %s93 = sphi 0, %s77
      %s99 = sphi 0, %s101
      %s102 = sphi 0, %s99
      %s103 = sphi 0, %s102
      %s119 = sphi 0, %s103
      %s125 = sphi 0, %s127
      %s128 = sphi 0, %s125
      %s129 = sphi 0, %s128
      %s145 = sphi 0, %s129
      %s151 = sphi 0, %s153
      %s154 = sphi 0, %s151
      %s155 = sphi 0, %s154
      %s171 = sphi 0, %s155
    $region4: #{_augment.1} parent=1 // loop_header_branch
      %24 = sbr.rel (%p22) target = $region8
    $region5: #{_augment.1} parent=1 // loop_body
      %s26 = ssub.s32 %s21, 1
      %s27 = ssub.s32 %s21, 2
      %s28 = sadd.s32 %s21, 1
      %s30 = sadd.s32 %s29, 1
      %p33 = scmp.eq.s32.totalorder %s21, 1
      %p34 = scmp.ne.s32.totalorder %s29, %s31
      %p35 = scmp.eq.s32.totalorder %s21, 0
      %p36 = por %p34, %p35
      %p37 = scmp.ne.s32.totalorder %s29, %s31
      %p38 = scmp.eq.s32.totalorder %s26, 1
      %p39 = por %p37, %p38
      %p40 = scmp.ne.s32.totalorder %s31, %s32
      %p41 = scmp.eq.s32.totalorder %s26, 0
      %p42 = por %p40, %p41
      %p43 = scmp.ne.s32.totalorder %s31, %s32
      %p44 = scmp.eq.s32.totalorder %s27, 1
      %p45 = por %p43, %p44
      %p47 = scmp.ne.s32.totalorder %s32, %s46
      %p48 = scmp.eq.s32.totalorder %s27, 0
      %p49 = por %p47, %p48
      %s51 = sadd.s32 %s50, 1
      %p54 = scmp.eq.s32.totalorder %s21, 1
      %p55 = scmp.ne.s32.totalorder %s50, %s52
      %p56 = scmp.eq.s32.totalorder %s21, 0
      %p57 = por %p55, %p56
      %p58 = scmp.ne.s32.totalorder %s50, %s52
      %p59 = scmp.eq.s32.totalorder %s26, 1
      %p60 = por %p58, %p59
      %p61 = scmp.ne.s32.totalorder %s52, %s53
      %p62 = scmp.eq.s32.totalorder %s26, 0
      %p63 = por %p61, %p62
      %p64 = scmp.ne.s32.totalorder %s52, %s53
      %p65 = scmp.eq.s32.totalorder %s27, 1
      %p66 = por %p64, %p65
      %p68 = scmp.ne.s32.totalorder %s53, %s67
      %p69 = scmp.eq.s32.totalorder %s27, 0
      %p70 = por %p68, %p69
      %s71 = ssub.s32 %s21, %s28
      %p72 = scmp.eq.s32.totalorder %s71, 0
      %s74 = sadd.s32 %s73, 1
      %s75 = scalar_select %p72, %s73, %s74
      %p78 = pneg %p72
      %p79 = scmp.eq.s32.totalorder %s21, 1
      %p80 = por %p78, %p79
      %p81 = scmp.ne.s32.totalorder %s73, %s76
      %p82 = scmp.eq.s32.totalorder %s21, 0
      %p83 = por %p81, %p82
      %p84 = scmp.ne.s32.totalorder %s73, %s76
      %p85 = scmp.eq.s32.totalorder %s26, 1
      %p86 = por %p84, %p85
      %p87 = scmp.ne.s32.totalorder %s76, %s77
      %p88 = scmp.eq.s32.totalorder %s26, 0
      %p89 = por %p87, %p88
      %p90 = scmp.ne.s32.totalorder %s76, %s77
      %p91 = scmp.eq.s32.totalorder %s27, 1
      %p92 = por %p90, %p91
      %p94 = scmp.ne.s32.totalorder %s77, %s93
      %p95 = scmp.eq.s32.totalorder %s27, 0
      %p96 = por %p94, %p95
      %s97 = ssub.s32 %s21, %s28
      %p98 = scmp.eq.s32.totalorder %s97, 0
      %s100 = sadd.s32 %s99, 1
      %s101 = scalar_select %p98, %s99, %s100
      %p104 = pneg %p98
      %p105 = scmp.eq.s32.totalorder %s21, 1
      %p106 = por %p104, %p105
      %p107 = scmp.ne.s32.totalorder %s99, %s102
      %p108 = scmp.eq.s32.totalorder %s21, 0
      %p109 = por %p107, %p108
      %p110 = scmp.ne.s32.totalorder %s99, %s102
      %p111 = scmp.eq.s32.totalorder %s26, 1
      %p112 = por %p110, %p111
      %p113 = scmp.ne.s32.totalorder %s102, %s103
      %p114 = scmp.eq.s32.totalorder %s26, 0
      %p115 = por %p113, %p114
      %p116 = scmp.ne.s32.totalorder %s102, %s103
      %p117 = scmp.eq.s32.totalorder %s27, 1
      %p118 = por %p116, %p117
      %p120 = scmp.ne.s32.totalorder %s103, %s119
      %p121 = scmp.eq.s32.totalorder %s27, 0
      %p122 = por %p120, %p121
      %s123 = ssub.s32 %s21, %s28
      %p124 = scmp.eq.s32.totalorder %s123, 0
      %s126 = sadd.s32 %s125, 1
      %s127 = scalar_select %p124, %s125, %s126
      %p130 = pneg %p124
      %p131 = scmp.eq.s32.totalorder %s21, 1
      %p132 = por %p130, %p131
      %p133 = scmp.ne.s32.totalorder %s125, %s128
      %p134 = scmp.eq.s32.totalorder %s21, 0
      %p135 = por %p133, %p134
      %p136 = scmp.ne.s32.totalorder %s125, %s128
      %p137 = scmp.eq.s32.totalorder %s26, 1
      %p138 = por %p136, %p137
      %p139 = scmp.ne.s32.totalorder %s128, %s129
      %p140 = scmp.eq.s32.totalorder %s26, 0
      %p141 = por %p139, %p140
      %p142 = scmp.ne.s32.totalorder %s128, %s129
      %p143 = scmp.eq.s32.totalorder %s27, 1
      %p144 = por %p142, %p143
      %p146 = scmp.ne.s32.totalorder %s129, %s145
      %p147 = scmp.eq.s32.totalorder %s27, 0
      %p148 = por %p146, %p147
      %s149 = ssub.s32 %s21, %s28
      %p150 = scmp.eq.s32.totalorder %s149, 0
      %s152 = sadd.s32 %s151, 1
      %s153 = scalar_select %p150, %s151, %s152
      %p156 = pneg %p150
      %p157 = scmp.eq.s32.totalorder %s21, 1
      %p158 = por %p156, %p157
      %p159 = scmp.ne.s32.totalorder %s151, %s154
      %p160 = scmp.eq.s32.totalorder %s21, 0
      %p161 = por %p159, %p160
      %p162 = scmp.ne.s32.totalorder %s151, %s154
      %p163 = scmp.eq.s32.totalorder %s26, 1
      %p164 = por %p162, %p163
      %p165 = scmp.ne.s32.totalorder %s154, %s155
      %p166 = scmp.eq.s32.totalorder %s26, 0
      %p167 = por %p165, %p166
      %p168 = scmp.ne.s32.totalorder %s154, %s155
      %p169 = scmp.eq.s32.totalorder %s27, 1
      %p170 = por %p168, %p169
      %p172 = scmp.ne.s32.totalorder %s155, %s171
      %p173 = scmp.eq.s32.totalorder %s27, 0
      %p174 = por %p172, %p173
      %p175 = scmp.le.s32.totalorder 1, %s21
      %p176 = scmp.lt.s32.totalorder %s21, 3
      %p177 = pnand %p175, %p176
      %p178 = pneg %p177
      // Predicated region
      $region9: #{_augment.1} parent=5 // pred_check
        _
      $region10: #{_augment.1} parent=5 // pred_check_branch
        %180 = sbr.rel (%p177) target = $region12
      $region11: #{_augment.1} parent=5 // pred_region
        %s181 = ssub.s32 %s21, 1
        // Predicated region
        $region13: #{_augment.1} parent=11 // pred_check
          %p182 = pneg %p42
        $region14: #{_augment.1} parent=11 // pred_check_branch
          %184 = sbr.rel (%p182) target = $region16
        $region15: #{_augment.1} parent=11 // pred_region
          _
        $region16: #{_augment.1} parent=11 // pred_fallthru
          _
        // Predicated region
        $region17: #{_augment.1} parent=11 // pred_check
          %p185 = pneg %p63
        $region18: #{_augment.1} parent=11 // pred_check_branch
          %187 = sbr.rel (%p185) target = $region20
        $region19: #{_augment.1} parent=11 // pred_region
          _
        $region20: #{_augment.1} parent=11 // pred_fallthru
          _
      $region12: #{_augment.1} parent=5 // pred_fallthru
        _
      %p188 = scmp.lt.s32.totalorder %s21, 2
      // Predicated region
      $region21: #{_augment.1} parent=5 // pred_check
        %p189 = pneg %p188
      $region22: #{_augment.1} parent=5 // pred_check_branch
        %191 = sbr.rel (%p189) target = $region24
      $region23: #{_augment.1} parent=5 // pred_region
        // Predicated region
        $region25: #{_augment.1} parent=23 // pred_check
          %p192 = pneg %p83
        $region26: #{_augment.1} parent=23 // pred_check_branch
          %194 = sbr.rel (%p192) target = $region28
        $region27: #{_augment.1} parent=23 // pred_region
          %p195 = scmp.lt.s32.totalorder %s21, 1
          %s196 = scalar_select %p195, %s21, 1
          %s197 = smul.addr %s196, 8
          %s198 = smul.addr %s197, 4
          %s199 = scalar_lea.vmem %s3, %s198
        $region28: #{_augment.1} parent=23 // pred_fallthru
          _
        // Predicated region
        $region29: #{_augment.1} parent=23 // pred_check
          %p200 = pneg %p109
        $region30: #{_augment.1} parent=23 // pred_check_branch
          %202 = sbr.rel (%p200) target = $region32
        $region31: #{_augment.1} parent=23 // pred_region
          %p203 = scmp.lt.s32.totalorder %s21, 1
          %s204 = scalar_select %p203, %s21, 1
          %s205 = smul.addr %s204, 8
          %s206 = smul.addr %s205, 4
          %s207 = scalar_lea.vmem %s4, %s206
        $region32: #{_augment.1} parent=23 // pred_fallthru
          _
        // Predicated region
        $region33: #{_augment.1} parent=23 // pred_check
          %p208 = pneg %p135
        $region34: #{_augment.1} parent=23 // pred_check_branch
          %210 = sbr.rel (%p208) target = $region36
        $region35: #{_augment.1} parent=23 // pred_region
          %p211 = scmp.lt.s32.totalorder %s21, 1
          %s212 = scalar_select %p211, %s21, 1
          %s213 = scalar_lea.vmem %s5, %s212
        $region36: #{_augment.1} parent=23 // pred_fallthru
          _
      $region24: #{_augment.1} parent=5 // pred_fallthru
        _
      %p214 = scmp.le.s32.totalorder 1, %s21
      %p215 = scmp.lt.s32.totalorder %s21, 3
      %p216 = pnand %p214, %p215
      %p217 = pneg %p216
      // Predicated region
      $region37: #{_augment.1} parent=5 // pred_check
        _
      $region38: #{_augment.1} parent=5 // pred_check_branch
        %219 = sbr.rel (%p216) target = $region40
      $region39: #{_augment.1} parent=5 // pred_region
        %s220 = ssub.s32 %s21, 1
        %p221 = pneg %p42
        %p222 = pneg %p39
        %p223 = pneg %p63
        %p224 = pneg %p60
        %p225 = scmp.lt.s32.totalorder %s26, 1
        %s226 = scalar_select %p225, %s26, 1
        %s227 = smul.addr %s226, 8
        %s228 = smul.addr %s227, 4
        %s229 = scalar_lea.vmem %s3, %s228
        %p230 = pneg %p89
        %p231 = pneg %p86
        %p232 = scmp.lt.s32.totalorder %s26, 1
        %s233 = scalar_select %p232, %s26, 1
        %s234 = smul.addr %s233, 8
        %s235 = smul.addr %s234, 4
        %s236 = scalar_lea.vmem %s4, %s235
        %p237 = pneg %p115
        %p238 = pneg %p112
        %p239 = scmp.lt.s32.totalorder %s26, 1
        %s240 = scalar_select %p239, %s26, 1
        %s241 = scalar_lea.vmem %s5, %s240
        %p242 = pneg %p141
        %p243 = pneg %p138
        %p244 = pneg %p167
        %p245 = pneg %p164
        %s246 = sand.u32 %s154, 1
        %s247 = scalar_lea.sflag [#allocation5], %s246
        %s248 = sand.u32 %s154, 1
        %s249 = smul.addr %s248, 64
        %s250 = scalar_lea.vmem [#allocation4], %s249
        %p251 = scmp.lt.s32.totalorder %s26, 1
        %s252 = scalar_select %p251, %s26, 1
        %s253 = smul.addr %s252, 8
        %s254 = smul.addr %s253, 4
        %s255 = scalar_lea.vmem %s3, %s254
        %p256 = scmp.lt.s32.totalorder %s26, 1
        %s257 = scalar_select %p256, %s26, 1
        %s258 = smul.addr %s257, 8
        %s259 = smul.addr %s258, 4
        %s260 = scalar_lea.vmem %s4, %s259
        %p261 = scmp.lt.s32.totalorder %s26, 1
        %s262 = scalar_select %p261, %s26, 1
        %s263 = scalar_lea.vmem %s5, %s262
        %v265 = vld [vmem:[%s1] sm:$0xff]
        %v266 = vld [vmem:[%s1 + $0x8] sm:$0xff]
        %v267 = vld [vmem:[%s1 + $0x10] sm:$0xff]
        %v268 = vld [vmem:[%s1 + $0x18] sm:$0xff]
        %v269 = vld [vmem:[%s1 + $0x20] sm:$0xff]
        %v270 = vld [vmem:[%s1 + $0x28] sm:$0xff]
        %v271 = vld [vmem:[%s1 + $0x30] sm:$0xff]
        %v272 = vld [vmem:[%s1 + $0x38] sm:$0xff]
        %v273 = vld [vmem:[%s2] sm:$0xff]
        %v274 = vld [vmem:[%s2 + $0x8] sm:$0xff]
        %v275 = vld [vmem:[%s2 + $0x10] sm:$0xff]
        %v276 = vld [vmem:[%s2 + $0x18] sm:$0xff]
        %v277 = vld [vmem:[%s2 + $0x20] sm:$0xff]
        %v278 = vld [vmem:[%s2 + $0x28] sm:$0xff]
        %v279 = vld [vmem:[%s2 + $0x30] sm:$0xff]
        %v280 = vld [vmem:[%s2 + $0x38] sm:$0xff]
        %s281 = sld [smem:[#allocation3 + %s26]]
        %v282 = vmax.f32 %v265, %v273
        %v283 = vmax.f32 %v266, %v274
        %v284 = vmax.f32 %v267, %v275
        %v285 = vmax.f32 %v268, %v276
        %v286 = vmax.f32 %v269, %v277
        %v287 = vmax.f32 %v270, %v278
        %v288 = vmax.f32 %v271, %v279
        %v289 = vmax.f32 %v272, %v280
        %v290 = vmin.f32 %v265, %v273
        %v291 = vmin.f32 %v266, %v274
        %v292 = vmin.f32 %v267, %v275
        %v293 = vmin.f32 %v268, %v276
        %v294 = vmin.f32 %v269, %v277
        %v295 = vmin.f32 %v270, %v278
        %v296 = vmin.f32 %v271, %v279
        %v297 = vmin.f32 %v272, %v280
        %vm298 = vcmp.ge.f32.partialorder %v265, %v273
        %vm299 = vcmp.ge.f32.partialorder %v266, %v274
        %vm300 = vcmp.ge.f32.partialorder %v267, %v275
        %vm301 = vcmp.ge.f32.partialorder %v268, %v276
        %vm302 = vcmp.ge.f32.partialorder %v269, %v277
        %vm303 = vcmp.ge.f32.partialorder %v270, %v278
        %vm304 = vcmp.ge.f32.partialorder %v271, %v279
        %vm305 = vcmp.ge.f32.partialorder %v272, %v280
        %s306 = ssub.f32 1.0, %s281
        %v307 = vstv %s306
        %v308 = vstv %s281
        %v309 = vsel %vm298, %v307, %v308
        %v310 = vsel %vm299, %v307, %v308
        %v311 = vsel %vm300, %v307, %v308
        %v312 = vsel %vm301, %v307, %v308
        %v313 = vsel %vm302, %v307, %v308
        %v314 = vsel %vm303, %v307, %v308
        %v315 = vsel %vm304, %v307, %v308
        %v316 = vsel %vm305, %v307, %v308
        %v317 = vsub.f32 1.0, %v309
        %v318 = vsub.f32 1.0, %v310
        %v319 = vsub.f32 1.0, %v311
        %v320 = vsub.f32 1.0, %v312
        %v321 = vsub.f32 1.0, %v313
        %v322 = vsub.f32 1.0, %v314
        %v323 = vsub.f32 1.0, %v315
        %v324 = vsub.f32 1.0, %v316
        %v325 = vsub.f32 %v290, %v282
        %v326 = vsub.f32 %v291, %v283
        %v327 = vsub.f32 %v292, %v284
        %v328 = vsub.f32 %v293, %v285
        %v329 = vsub.f32 %v294, %v286
        %v330 = vsub.f32 %v295, %v287
        %v331 = vsub.f32 %v296, %v288
        %v332 = vsub.f32 %v297, %v289
        %v333 = vmul.f32 %v325, 1.442695
        %v334 = vpow.pop %v333
        %v335 = vmul.f32 %v326, 1.442695
        %v336 = vpow.pop %v335
        %v337 = vmul.f32 %v327, 1.442695
        %v338 = vpow.pop %v337
        %v339 = vmul.f32 %v328, 1.442695
        %v340 = vpow.pop %v339
        %v341 = vmul.f32 %v329, 1.442695
        %v342 = vpow.pop %v341
        %v343 = vmul.f32 %v330, 1.442695
        %v344 = vpow.pop %v343
        %v345 = vmul.f32 %v331, 1.442695
        %v346 = vpow.pop %v345
        %v347 = vmul.f32 %v332, 1.442695
        %v348 = vpow.pop %v347
        %v349 = vmul.f32 %v317, %v334
        %v350 = vmul.f32 %v318, %v336
        %v351 = vmul.f32 %v319, %v338
        %v352 = vmul.f32 %v320, %v340
        %v353 = vmul.f32 %v321, %v342
        %v354 = vmul.f32 %v322, %v344
        %v355 = vmul.f32 %v323, %v346
        %v356 = vmul.f32 %v324, %v348
        %v357 = vadd.f32 %v309, %v349
        %v358 = vadd.f32 %v310, %v350
        %v359 = vadd.f32 %v311, %v351
        %v360 = vadd.f32 %v312, %v352
        %v361 = vadd.f32 %v313, %v353
        %v362 = vadd.f32 %v314, %v354
        %v363 = vadd.f32 %v315, %v355
        %v364 = vadd.f32 %v316, %v356
        %v365 = vmax.f32 %v282, -15.942385
        %v366 = vmax.f32 %v283, -15.942385
        %v367 = vmax.f32 %v284, -15.942385
        %v368 = vmax.f32 %v285, -15.942385
        %v369 = vmax.f32 %v286, -15.942385
        %v370 = vmax.f32 %v287, -15.942385
        %v371 = vmax.f32 %v288, -15.942385
        %v372 = vmax.f32 %v289, -15.942385
        %v373 = vsub.f32 0.0, %v365
        %v374 = vsub.f32 0.0, %v366
        %v375 = vsub.f32 0.0, %v367
        %v376 = vsub.f32 0.0, %v368
        %v377 = vsub.f32 0.0, %v369
        %v378 = vsub.f32 0.0, %v370
        %v379 = vsub.f32 0.0, %v371
        %v380 = vsub.f32 0.0, %v372
        %v381 = vmul.f32 %v373, 1.442695
        %v382 = vpow.pop %v381
        %v383 = vmul.f32 %v374, 1.442695
        %v384 = vpow.pop %v383
        %v385 = vmul.f32 %v375, 1.442695
        %v386 = vpow.pop %v385
        %v387 = vmul.f32 %v376, 1.442695
        %v388 = vpow.pop %v387
        %v389 = vmul.f32 %v377, 1.442695
        %v390 = vpow.pop %v389
        %v391 = vmul.f32 %v378, 1.442695
        %v392 = vpow.pop %v391
        %v393 = vmul.f32 %v379, 1.442695
        %v394 = vpow.pop %v393
        %v395 = vmul.f32 %v380, 1.442695
        %v396 = vpow.pop %v395
        %v397 = vmul.f32 %v382, 1.1920929e-07
        %v398 = vmul.f32 %v384, 1.1920929e-07
        %v399 = vmul.f32 %v386, 1.1920929e-07
        %v400 = vmul.f32 %v388, 1.1920929e-07
        %v401 = vmul.f32 %v390, 1.1920929e-07
        %v402 = vmul.f32 %v392, 1.1920929e-07
        %v403 = vmul.f32 %v394, 1.1920929e-07
        %v404 = vmul.f32 %v396, 1.1920929e-07
        %v405 = vadd.f32 %v357, %v397
        %v406 = vadd.f32 %v358, %v398
        %v407 = vadd.f32 %v359, %v399
        %v408 = vadd.f32 %v360, %v400
        %v409 = vadd.f32 %v361, %v401
        %v410 = vadd.f32 %v362, %v402
        %v411 = vadd.f32 %v363, %v403
        %v412 = vadd.f32 %v364, %v404
        %v413 = vlog2.pop %v405
        %v414 = vmul.f32 %v413, 0.6931472
        %v415 = vlog2.pop %v406
        %v416 = vmul.f32 %v415, 0.6931472
        %v417 = vlog2.pop %v407
        %v418 = vmul.f32 %v417, 0.6931472
        %v419 = vlog2.pop %v408
        %v420 = vmul.f32 %v419, 0.6931472
        %v421 = vlog2.pop %v409
        %v422 = vmul.f32 %v421, 0.6931472
        %v423 = vlog2.pop %v410
        %v424 = vmul.f32 %v423, 0.6931472
        %v425 = vlog2.pop %v411
        %v426 = vmul.f32 %v425, 0.6931472
        %v427 = vlog2.pop %v412
        %v428 = vmul.f32 %v427, 0.6931472
        %v429 = vadd.f32 %v282, %v414
        %v430 = vadd.f32 %v283, %v416
        %v431 = vadd.f32 %v284, %v418
        %v432 = vadd.f32 %v285, %v420
        %v433 = vadd.f32 %v286, %v422
        %v434 = vadd.f32 %v287, %v424
        %v435 = vadd.f32 %v288, %v426
        %v436 = vadd.f32 %v289, %v428
        %v437 = vld [vmem:[%s255] sm:$0xf]
        %v438 = vld [vmem:[%s255 + $0x4] sm:$0xf]
        %v439 = vld [vmem:[%s255 + $0x8] sm:$0xf]
        %v440 = vld [vmem:[%s255 + $0xc] sm:$0xf]
        %v441 = vld [vmem:[%s255 + $0x10] sm:$0xf]
        %v442 = vld [vmem:[%s255 + $0x14] sm:$0xf]
        %v443 = vld [vmem:[%s255 + $0x18] sm:$0xf]
        %v444 = vld [vmem:[%s255 + $0x1c] sm:$0xf]
        %v445 = vpack.c.bf16 %v430, %v429
        %v446 = vpack.c.bf16 %v432, %v431
        %v447 = vpack.c.bf16 %v434, %v433
        %v448 = vpack.c.bf16 %v436, %v435
        %v457 = vunpack.c.l.b16 %v437
        %v458 = vunpack.c.l.b16 %v438
        %v459 = vunpack.c.l.b16 %v439
        %v460 = vunpack.c.l.b16 %v440
        %v461 = vunpack.c.l.b16 %v441
        %v462 = vunpack.c.l.b16 %v442
        %v463 = vunpack.c.l.b16 %v443
        %v464 = vunpack.c.l.b16 %v444
        %v465 = vpack.c.b16 %v458, %v457
        %v466 = vpack.c.b16 %v460, %v459
        %v467 = vpack.c.b16 %v462, %v461
        %v468 = vpack.c.b16 %v464, %v463
        %vm469 = vcmask 523264
        %v471 = vsel %vm469, %v465, 0
        %v474 = vsel %vm469, %v466, 0
        %v477 = vsel %vm469, %v467, 0
        %v480 = vsel %vm469, %v468, 0
        %482 = vmatprep.subr.bf16.mxu0 0
        %483 = vmatpush1.bf16.msra.mxu0 %v445
        %484 = vmatprep.subr.bf16.mxu0 0
        %485 = vmatpush1.bf16.msra.mxu0 %v446
        %486 = vmatprep.subr.bf16.mxu0 0
        %487 = vmatpush1.bf16.msra.mxu0 %v447
        %488 = vmatprep.subr.bf16.mxu0 0
        %489 = vmatpush1.bf16.msra.mxu0 %v448
        %490 = vmatprep.subr.bf16.mxu0 0
        %491 = vmatpush1.bf16.msra.mxu0 0
        %492 = vmatprep.subr.bf16.mxu0 0
        %493 = vmatpush1.bf16.msra.mxu0 0
        %494 = vmatprep.subr.bf16.mxu0 0
        %495 = vmatpush1.bf16.msra.mxu0 0
        %496 = vmatprep.subr.bf16.mxu0 0
        %497 = vmatpush1.bf16.msra.mxu0 0
        %498 = vmatprep.subr.bf16.mxu0 0
        %499 = vmatpush1.bf16.msra.mxu0 0
        %500 = vmatprep.subr.bf16.mxu0 0
        %501 = vmatpush1.bf16.msra.mxu0 0
        %502 = vmatprep.subr.bf16.mxu0 0
        %503 = vmatpush1.bf16.msra.mxu0 0
        %504 = vmatprep.subr.bf16.mxu0 0
        %505 = vmatpush1.bf16.msra.mxu0 0
        %506 = vmatprep.subr.bf16.mxu0 0
        %507 = vmatpush1.bf16.msra.mxu0 0
        %508 = vmatprep.subr.bf16.mxu0 0
        %509 = vmatpush1.bf16.msra.mxu0 0
        %510 = vmatprep.subr.bf16.mxu0 0
        %511 = vmatpush1.bf16.msra.mxu0 0
        %512 = vmatprep.subr.bf16.mxu0 0
        %513 = vmatpush1.bf16.msra.mxu0 0
        %514 = vmatprep.mubr.bf16.mxu0 0
        %515 = vmatmul.mubr.bf16.gmra.mrb[0].mxu0 %v471
        %v516 = vpop.f32.mrb[0].mxu0
        %v517 = vadd.f32 0.0, %v516
        %v518 = vpop.f32.mrb[0].mxu0
        %v519 = vpop.f32.mrb[0].mxu0
        %v520 = vadd.f32 0.0, %v519
        %v521 = vpop.f32.mrb[0].mxu0
        %522 = vmatprep.mubr.bf16.mxu0 0
        %523 = vmatmul.mubr.bf16.gmra.mrb[0].mxu0 %v474
        %v524 = vpop.f32.mrb[0].mxu0
        %v525 = vadd.f32 0.0, %v524
        %v526 = vpop.f32.mrb[0].mxu0
        %v527 = vpop.f32.mrb[0].mxu0
        %v528 = vadd.f32 0.0, %v527
        %v529 = vpop.f32.mrb[0].mxu0
        %530 = vmatprep.mubr.bf16.mxu0 0
        %531 = vmatmul.mubr.bf16.gmra.mrb[0].mxu0 %v477
        %v532 = vpop.f32.mrb[0].mxu0
        %v533 = vadd.f32 0.0, %v532
        %v534 = vpop.f32.mrb[0].mxu0
        %v535 = vpop.f32.mrb[0].mxu0
        %v536 = vadd.f32 0.0, %v535
        %v537 = vpop.f32.mrb[0].mxu0
        %538 = vmatprep.mubr.bf16.mxu0 0
        %539 = vmatmul.mubr.bf16.gmra.mrb[0].mxu0 %v480
        %v540 = vpop.f32.mrb[0].mxu0
        %v541 = vadd.f32 0.0, %v540
        %v542 = vpop.f32.mrb[0].mxu0
        %v543 = vpop.f32.mrb[0].mxu0
        %v544 = vadd.f32 0.0, %v543
        %v545 = vpop.f32.mrb[0].mxu0
        %546 = vdwg.mxu0
        %v547 = vpack.c.bf16 %v520, %v517
        %v548 = vpack.c.bf16 %v528, %v525
        %v549 = vpack.c.bf16 %v536, %v533
        %v550 = vpack.c.bf16 %v544, %v541
        %v551 = vld [vmem:[%s260] sm:$0xf]
        %v552 = vld [vmem:[%s260 + $0x4] sm:$0xf]
        %v553 = vld [vmem:[%s260 + $0x8] sm:$0xf]
        %v554 = vld [vmem:[%s260 + $0xc] sm:$0xf]
        %v555 = vld [vmem:[%s260 + $0x10] sm:$0xf]
        %v556 = vld [vmem:[%s260 + $0x14] sm:$0xf]
        %v557 = vld [vmem:[%s260 + $0x18] sm:$0xf]
        %v558 = vld [vmem:[%s260 + $0x1c] sm:$0xf]
        %v559 = vld [vmem:[%s263] sm:$0x1]
        %v561 = vlaneseq
        %v562 = vshrl.u32 %v561, 7
        %v563 = vsub.s32 0, %v562
        %v564 = vrot.slane %v559, %v563
        %v574 = vunpack.c.l.b16 %v551
        %v575 = vunpack.c.l.b16 %v552
        %v576 = vunpack.c.l.b16 %v553
        %v577 = vunpack.c.l.b16 %v554
        %v578 = vunpack.c.l.b16 %v555
        %v579 = vunpack.c.l.b16 %v556
        %v580 = vunpack.c.l.b16 %v557
        %v581 = vunpack.c.l.b16 %v558
        %v582 = vpack.c.b16 %v575, %v574
        %v583 = vpack.c.b16 %v577, %v576
        %v584 = vpack.c.b16 %v579, %v578
        %v585 = vpack.c.b16 %v581, %v580
        %v591 = vsel %vm469, %v547, 0
        %v594 = vsel %vm469, %v548, 0
        %v597 = vsel %vm469, %v549, 0
        %v600 = vsel %vm469, %v550, 0
        %602 = vmatprep.subr.bf16.mxu0 0
        %603 = vmatpush1.bf16.msra.mxu0 %v582
        %604 = vmatprep.subr.bf16.mxu0 0
        %605 = vmatpush1.bf16.msra.mxu0 %v583
        %606 = vmatprep.subr.bf16.mxu0 0
        %607 = vmatpush1.bf16.msra.mxu0 %v584
        %608 = vmatprep.subr.bf16.mxu0 0
        %609 = vmatpush1.bf16.msra.mxu0 %v585
        %610 = vmatprep.subr.bf16.mxu0 0
        %611 = vmatpush1.bf16.msra.mxu0 0
        %612 = vmatprep.subr.bf16.mxu0 0
        %613 = vmatpush1.bf16.msra.mxu0 0
        %614 = vmatprep.subr.bf16.mxu0 0
        %615 = vmatpush1.bf16.msra.mxu0 0
        %616 = vmatprep.subr.bf16.mxu0 0
        %617 = vmatpush1.bf16.msra.mxu0 0
        %618 = vmatprep.subr.bf16.mxu0 0
        %619 = vmatpush1.bf16.msra.mxu0 0
        %620 = vmatprep.subr.bf16.mxu0 0
        %621 = vmatpush1.bf16.msra.mxu0 0
        %622 = vmatprep.subr.bf16.mxu0 0
        %623 = vmatpush1.bf16.msra.mxu0 0
        %624 = vmatprep.subr.bf16.mxu0 0
        %625 = vmatpush1.bf16.msra.mxu0 0
        %626 = vmatprep.subr.bf16.mxu0 0
        %627 = vmatpush1.bf16.msra.mxu0 0
        %628 = vmatprep.subr.bf16.mxu0 0
        %629 = vmatpush1.bf16.msra.mxu0 0
        %630 = vmatprep.subr.bf16.mxu0 0
        %631 = vmatpush1.bf16.msra.mxu0 0
        %632 = vmatprep.subr.bf16.mxu0 0
        %633 = vmatpush1.bf16.msra.mxu0 0
        %634 = vmatprep.mubr.bf16.mxu0 0
        %635 = vmatmul.mubr.bf16.gmra.mrb[0].mxu0 %v591
        %v636 = vpop.f32.mrb[0].mxu0
        %v637 = vadd.f32 %v564, %v636
        %v638 = vpop.f32.mrb[0].mxu0
        %v639 = vpop.f32.mrb[0].mxu0
        %v640 = vadd.f32 %v564, %v639
        %v641 = vpop.f32.mrb[0].mxu0
        %642 = vmatprep.mubr.bf16.mxu0 0
        %643 = vmatmul.mubr.bf16.gmra.mrb[0].mxu0 %v594
        %v644 = vpop.f32.mrb[0].mxu0
        %v645 = vadd.f32 %v564, %v644
        %v646 = vpop.f32.mrb[0].mxu0
        %v647 = vpop.f32.mrb[0].mxu0
        %v648 = vadd.f32 %v564, %v647
        %v649 = vpop.f32.mrb[0].mxu0
        %650 = vmatprep.mubr.bf16.mxu0 0
        %651 = vmatmul.mubr.bf16.gmra.mrb[0].mxu0 %v597
        %v652 = vpop.f32.mrb[0].mxu0
        %v653 = vadd.f32 %v564, %v652
        %v654 = vpop.f32.mrb[0].mxu0
        %v655 = vpop.f32.mrb[0].mxu0
        %v656 = vadd.f32 %v564, %v655
        %v657 = vpop.f32.mrb[0].mxu0
        %658 = vmatprep.mubr.bf16.mxu0 0
        %659 = vmatmul.mubr.bf16.gmra.mrb[0].mxu0 %v600
        %v660 = vpop.f32.mrb[0].mxu0
        %v661 = vadd.f32 %v564, %v660
        %v662 = vpop.f32.mrb[0].mxu0
        %v663 = vpop.f32.mrb[0].mxu0
        %v664 = vadd.f32 %v564, %v663
        %v665 = vpop.f32.mrb[0].mxu0
        %666 = vdwg.mxu0
        %667 = vst.msk [vmem:[%s250] sm:$0xff] %vm469, %v637
        %668 = vst.msk [vmem:[%s250 + $0x8] sm:$0xff] %vm469, %v640
        %669 = vst.msk [vmem:[%s250 + $0x10] sm:$0xff] %vm469, %v645
        %670 = vst.msk [vmem:[%s250 + $0x18] sm:$0xff] %vm469, %v648
        %671 = vst.msk [vmem:[%s250 + $0x20] sm:$0xff] %vm469, %v653
        %672 = vst.msk [vmem:[%s250 + $0x28] sm:$0xff] %vm469, %v656
        %673 = vst.msk [vmem:[%s250 + $0x30] sm:$0xff] %vm469, %v661
        %674 = vst.msk [vmem:[%s250 + $0x38] sm:$0xff] %vm469, %v664
        %s675 = sand.u32 %s154, 1
        %s676 = scalar_lea.sflag [#allocation5], %s675
        %s677 = sand.u32 %s154, 1
        %s678 = smul.addr %s677, 64
        %s679 = scalar_lea.vmem [#allocation4], %s678
        // Predicated region
        $region41: #{_augment.1} parent=39 // pred_check
          %p680 = pneg %p164
        $region42: #{_augment.1} parent=39 // pred_check_branch
          %682 = sbr.rel (%p680) target = $region44
        $region43: #{_augment.1} parent=39 // pred_region
          %s684 = ssub.s32 1024, 1024
          %685 = vsyncadd %s676, %s684
          %s686 = smul.addr %s26, 8
          %s687 = smul.addr %s686, 128
          %s688 = scalar_lea.hbm %s6, %s687
          %s689 = sshll.u32 %s679, 4
          %s690 = int_to_ptr.vmem [resolvable:$true] %s689
          %695 = dma.vmem_to_hbm [thread:$0]  %s690, 1024, %s688, %s676, 128, 128, 8
        $region44: #{_augment.1} parent=39 // pred_fallthru
          _
      $region40: #{_augment.1} parent=5 // pred_fallthru
        _
      %p696 = scmp.le.s32.totalorder 2, %s21
      // Predicated region
      $region45: #{_augment.1} parent=5 // pred_check
        %p697 = pneg %p696
      $region46: #{_augment.1} parent=5 // pred_check_branch
        %699 = sbr.rel (%p697) target = $region48
      $region47: #{_augment.1} parent=5 // pred_region
        %s700 = ssub.s32 %s21, 2
        // Predicated region
        $region49: #{_augment.1} parent=47 // pred_check
          %p701 = pneg %p170
        $region50: #{_augment.1} parent=47 // pred_check_branch
          %703 = sbr.rel (%p701) target = $region52
        $region51: #{_augment.1} parent=47 // pred_region
          %s704 = sand.u32 %s155, 1
          %s705 = scalar_lea.sflag [#allocation5], %s704
          %s706 = sand.u32 %s155, 1
          %s707 = smul.addr %s706, 64
          %s708 = scalar_lea.vmem [#allocation4], %s707
          %709 = dma.done %s705, 1024
        $region52: #{_augment.1} parent=47 // pred_fallthru
          _
      $region48: #{_augment.1} parent=5 // pred_fallthru
        _
    $region6: #{_augment.1} parent=1 // loop_footer
      %s25 = sadd.s32 1, %s21
    $region7: #{_augment.1} parent=1 // loop_footer_branch
      %20 = sbr.rel target = $region3
    $region8: #{_augment.1} parent=1 // loop_exit
      _
    %710 = vsyncpa [#allocation5], 1
    %s711 = scalar_lea.sflag [#allocation5], 1
    %712 = vsyncpa %s711, 1

</llo_original>
